<compile_context>
chip_gen: v7x
topology: tpu7x:2x2x1
jax: 0.10.0
libtpu: 0.0.40
codegen_flags: <defaults>
</compile_context>

<pallas_src>
import jax
import jax.numpy as jnp
from jax.experimental import pallas as pl
from jax.experimental.pallas import tpu as pltpu


# ----------------------------------------------------------------------------
# Wrapper-side weight repacking (done once per call; cache in real use).
# ----------------------------------------------------------------------------
def _band_weight(w_hwio, W):
    """(K, K, Cin, Cout) HWIO conv weight -> (K, W*Cin, W*Cout) banded weight.

    For a fixed vertical tap ky, out_row = in_row @ T[ky] implements the full
    horizontal convolution (including SAME zero padding) over the lane-folded
    (W*Cin) row, producing a lane-folded (W*Cout) row.
    """
    K, _, Cin, Cout = w_hwio.shape
    pad = K // 2
    wp = jnp.arange(W)[:, None]                 # input column
    wo = jnp.arange(W)[None, :]                 # output column
    kx = wp - wo + pad                          # (W, W) horizontal tap index
    valid = (kx >= 0) & (kx < K)
    kx_c = jnp.clip(kx, 0, K - 1)
    t = w_hwio[:, kx_c]                         # (K, W, W, Cin, Cout)
    t = t * valid[None, :, :, None, None].astype(w_hwio.dtype)
    t = jnp.transpose(t, (0, 1, 3, 2, 4))       # (K, W, Cin, W, Cout)
    return t.reshape(K, W * Cin, W * Cout)


def _block_diag_1x1(wa, W):
    """(Cin, Cout) 1x1 conv weight -> block-diagonal (W*Cin, W*Cout) matrix."""
    Cin, Cout = wa.shape
    eye = jnp.eye(W, dtype=wa.dtype)
    t = jnp.einsum("wv,ic->wivc", eye, wa)      # (W, Cin, W, Cout)
    return t.reshape(W * Cin, W * Cout)


def _lane_bias(b, W):
    """(Cout,) bias -> (1, W*Cout) lane-folded bias."""
    return jnp.tile(b, W).reshape(1, W * b.shape[0]).astype(jnp.float32)


def _pick_batch_block(N, bytes_per_elem, budget=4 * 1024 * 1024):
    """Largest divisor of N under a VMEM budget, keeping >=2 grid steps when
    N >= 2 so a parallel axis is available for both v7x TensorCores."""
    best = 1
    for bt in range(1, N + 1):
        if N % bt:
            continue
        if bt * bytes_per_elem > budget:
            continue
        if N >= 2 and (N // bt) < 2:
            continue
        best = bt
    return best


# ----------------------------------------------------------------------------
# Kernel
# ----------------------------------------------------------------------------
def _make_resblock_kernel(H, W, K, CIN, COUT, use_adapt, bt):
    PAD = K // 2
    LIN, LOUT = W * CIN, W * COUT

    def _conv(src_bf16, t_ref, acc_ref):
        """One KxK conv on a lane-folded (H, W*C) bf16 slab.

        Center tap initialises the accumulator (full rows, no zero-fill);
        off-center vertical taps accumulate into partial row ranges, which
        implements the vertical SAME halo without any padded buffer.
        """
        acc_ref[...] = jnp.dot(src_bf16, t_ref[PAD],
                               preferred_element_type=jnp.float32)
        for ky in range(K):
            if ky == PAD:
                continue
            dy = ky - PAD
            in_lo, in_hi = max(0, dy), min(H, H + dy)
            out_lo, out_hi = max(0, -dy), min(H, H - dy)
            part = jnp.dot(src_bf16[in_lo:in_hi, :], t_ref[ky],
                           preferred_element_type=jnp.float32)
            acc_ref[out_lo:out_hi, :] = acc_ref[out_lo:out_hi, :] + part

    def kernel(x_ref, t1_ref, b1_ref, t2_ref, b2_ref, ta_ref, ba_ref,
               o_ref, acc_ref):
        for b in range(bt):                       # static inner batch loop
            x = x_ref[b]                          # (H, W*CIN) f32
            # relu1 in f32 (v5e: no bf16 VPU); cast only at the MXU input.
            xr = jnp.maximum(x, 0.0).astype(jnp.bfloat16)

            # ---- conv1 + bias + relu2 ----
            _conv(xr, t1_ref, acc_ref)
            y = jnp.maximum(acc_ref[...] + b1_ref[...], 0.0)   # (H, W*COUT) f32

            # ---- conv2 + bias ----
            _conv(y.astype(jnp.bfloat16), t2_ref, acc_ref)
            h2 = acc_ref[...] + b2_ref[...]

            # ---- residual path on the ORIGINAL (non-relu'd) x ----
            if use_adapt:
                res = jnp.dot(x.astype(jnp.bfloat16), ta_ref[...],
                              preferred_element_type=jnp.float32) + ba_ref[...]
            else:
                res = x                           # CIN == COUT

            o_ref[b] = res + h2                   # lane-dense (H, W*COUT) store

    return kernel


# ----------------------------------------------------------------------------
# Public wrapper
# ----------------------------------------------------------------------------
def resblock_pallas(x_nchw, params, *, batch_block=None):
    """x_nchw: (N, Cin, H, W) float32. Returns (N, Cout, H, W) float32."""
    w1, b1, w2, b2, wa, ba = (params["w1"], params["b1"], params["w2"],
                              params["b2"], params["wa"], params["ba"])
    N, CIN, H, W = x_nchw.shape
    K = w1.shape[0]
    COUT = w1.shape[3]
    use_adapt = wa is not None
    assert K % 2 == 1, "SAME-padding formulation requires odd kernel_size"

    LIN, LOUT = W * CIN, W * COUT

    # Weight repacking: banded lane-folded weights, pre-cast to bf16.
    t1 = _band_weight(w1, W).astype(jnp.bfloat16)          # (K, LIN,  LOUT)
    t2 = _band_weight(w2, W).astype(jnp.bfloat16)          # (K, LOUT, LOUT)
    b1_l = _lane_bias(b1, W)                               # (1, LOUT) f32
    b2_l = _lane_bias(b2, W)
    if use_adapt:
        ta = _block_diag_1x1(wa, W).astype(jnp.bfloat16)   # (LIN, LOUT)
        ba_l = _lane_bias(ba, W)
    else:
        ta = jnp.zeros((LIN, LOUT), jnp.bfloat16)
        ba_l = jnp.zeros((1, LOUT), jnp.float32)

    # NCHW -> lane-dense (N, H, W*Cin) slab.  No host-side spatial padding.
    x_slab = jnp.transpose(x_nchw, (0, 2, 3, 1)).reshape(N, H, LIN)

    if batch_block is None:
        batch_block = _pick_batch_block(N, H * (LIN + LOUT) * 4)
    bt = batch_block
    assert N % bt == 0
    grid = (N // bt,)

    kernel = _make_resblock_kernel(H, W, K, CIN, COUT, use_adapt, bt)

    out_slab = pl.pallas_call(
        kernel,
        out_shape=jax.ShapeDtypeStruct((N, H, LOUT), jnp.float32),
        grid_spec=pltpu.PrefetchScalarGridSpec(
            num_scalar_prefetch=0,
            grid=grid,
            in_specs=[
                pl.BlockSpec((bt, H, LIN), lambda n: (n, 0, 0)),
                pl.BlockSpec((K, LIN, LOUT), lambda n: (0, 0, 0)),
                pl.BlockSpec((1, LOUT), lambda n: (0, 0)),
                pl.BlockSpec((K, LOUT, LOUT), lambda n: (0, 0, 0)),
                pl.BlockSpec((1, LOUT), lambda n: (0, 0)),
                pl.BlockSpec((LIN, LOUT), lambda n: (0, 0)),
                pl.BlockSpec((1, LOUT), lambda n: (0, 0)),
            ],
            out_specs=pl.BlockSpec((bt, H, LOUT), lambda n: (n, 0, 0)),
            scratch_shapes=[pltpu.VMEM((H, LOUT), jnp.float32)],
        ),
        compiler_params=pltpu.CompilerParams(
            dimension_semantics=("parallel",),
            vmem_limit_bytes=32 * 1024 * 1024),
    )(x_slab, t1, b1_l, t2, b2_l, ta, ba_l)

    out_nhwc = out_slab.reshape(N, H, W, COUT)
    return jnp.transpose(out_nhwc, (0, 3, 1, 2))           # back to NCHW


# ----------------------------------------------------------------------------
# Params + pure-JAX reference (for correctness checking)
# ----------------------------------------------------------------------------
def init_resblock_params(key, cin, cout, k):
    """Deterministic xavier_uniform weights (biases = 0), matching the module."""
    def xavier(key, shape, fan_in, fan_out):
        bound = (6.0 / (fan_in + fan_out)) ** 0.5
        return jax.random.uniform(key, shape, jnp.float32, -bound, bound)

    k1, k2, k3 = jax.random.split(key, 3)
    w1 = xavier(k1, (k, k, cin, cout), cin * k * k, cout * k * k)
    w2 = xavier(k2, (k, k, cout, cout), cout * k * k, cout * k * k)
    b1 = jnp.zeros((cout,), jnp.float32)
    b2 = jnp.zeros((cout,), jnp.float32)
    if cin != cout:
        wa = xavier(k3, (cin, cout), cin, cout)
        ba = jnp.zeros((cout,), jnp.float32)
    else:
        wa, ba = None, None
    return dict(w1=w1, b1=b1, w2=w2, b2=b2, wa=wa, ba=ba)


def resblock_reference(x_nchw, params):
    """Pure-JAX reference (lax.conv, f32) for correctness checking."""
    w1, b1, w2, b2, wa, ba = (params["w1"], params["b1"], params["w2"],
                              params["b2"], params["wa"], params["ba"])
    x = jnp.transpose(x_nchw, (0, 2, 3, 1))  # NHWC
    dn = ("NHWC", "HWIO", "NHWC")
    xr = jax.nn.relu(x)
    y = jax.lax.conv_general_dilated(xr, w1, (1, 1), "SAME",
                                     dimension_numbers=dn) + b1
    y = jax.nn.relu(y)
    y = jax.lax.conv_general_dilated(y, w2, (1, 1), "SAME",
                                     dimension_numbers=dn) + b2
    if wa is None:
        res = x
    else:
        res = jax.lax.conv_general_dilated(x, wa[None, None], (1, 1), "SAME",
                                           dimension_numbers=dn) + ba
    return jnp.transpose(res + y, (0, 3, 1, 2))


if __name__ == "__main__":
    key = jax.random.PRNGKey(0)
    kx, kp1, kp2 = jax.random.split(key, 3)

    # Case 1: inputchannel != outputchannel  -> adapt_conv path
    N, CIN, COUT, H, W, K = 2, 4, 8, 16, 16, 3
    x = jax.random.normal(kx, (N, CIN, H, W), jnp.float32)
    params = init_resblock_params(kp1, CIN, COUT, K)
    out = resblock_pallas(x, params)
    jax.block_until_ready(out)
    ref = resblock_reference(x, params)
    assert out.shape == (N, COUT, H, W)
    err = float(jnp.max(jnp.abs(out - ref)))
    scale = float(jnp.maximum(jnp.max(jnp.abs(ref)), 1.0))
    # bf16 MXU inputs (f32 accumulate) -> tolerance relaxed vs. pure f32.
    assert err / scale < 3e-2, (err, scale)

    # Case 2: inputchannel == outputchannel -> plain residual add
    params2 = init_resblock_params(kp2, COUT, COUT, K)
    x2 = jax.random.normal(kx, (N, COUT, H, W), jnp.float32)
    out2 = resblock_pallas(x2, params2)
    jax.block_until_ready(out2)
    ref2 = resblock_reference(x2, params2)
    err2 = float(jnp.max(jnp.abs(out2 - ref2)))
    scale2 = float(jnp.maximum(jnp.max(jnp.abs(ref2)), 1.0))
    assert err2 / scale2 < 3e-2, (err2, scale2)

    print("KERNEL_OK")
</pallas_src>

<mosaic_0001>
module attributes {stable_mosaic.version = 11 : i64} {
  func.func @kernel(%arg0: i32, %arg1: memref<1x16x64xf32, #tpu.memory_space<vmem>>, %arg2: memref<3x64x128xbf16, #tpu.memory_space<vmem>>, %arg3: memref<1x128xf32, #tpu.memory_space<vmem>>, %arg4: memref<3x128x128xbf16, #tpu.memory_space<vmem>>, %arg5: memref<1x128xf32, #tpu.memory_space<vmem>>, %arg6: memref<64x128xbf16, #tpu.memory_space<vmem>>, %arg7: memref<1x128xf32, #tpu.memory_space<vmem>>, %arg8: memref<1x16x128xf32, #tpu.memory_space<vmem>>, %arg9: memref<16x128xf32, #tpu.memory_space<vmem>>) attributes {dimension_semantics = [#tpu.dimension_semantics<parallel>], iteration_bounds = array<i64: 2>, scalar_prefetch = 0 : i64, scratch_operands = 1 : i64, tpu.core_type = #tpu.core_type<tc>, window_params = [{transform_indices = @transform_0, window_bounds = array<i64: 1, 16, 64>}, {pipeline_mode = #tpu.pipeline_mode<synchronous>, transform_indices = @transform_1, window_bounds = array<i64: 3, 64, 128>}, {pipeline_mode = #tpu.pipeline_mode<synchronous>, transform_indices = @transform_2, window_bounds = array<i64: 1, 128>}, {pipeline_mode = #tpu.pipeline_mode<synchronous>, transform_indices = @transform_3, window_bounds = array<i64: 3, 128, 128>}, {pipeline_mode = #tpu.pipeline_mode<synchronous>, transform_indices = @transform_4, window_bounds = array<i64: 1, 128>}, {pipeline_mode = #tpu.pipeline_mode<synchronous>, transform_indices = @transform_5, window_bounds = array<i64: 64, 128>}, {pipeline_mode = #tpu.pipeline_mode<synchronous>, transform_indices = @transform_6, window_bounds = array<i64: 1, 128>}, {transform_indices = @transform_7, window_bounds = array<i64: 1, 16, 128>}]} {
    %c0 = arith.constant 0 : index
    %c0_0 = arith.constant 0 : index
    %c0_1 = arith.constant 0 : index
    %0 = vector.load %arg1[%c0, %c0_0, %c0_1] : memref<1x16x64xf32, #tpu.memory_space<vmem>>, vector<1x16x64xf32>
    %1 = vector.shape_cast %0 : vector<1x16x64xf32> to vector<16x64xf32>
    %cst = arith.constant 0.000000e+00 : f32
    %2 = vector.broadcast %cst : f32 to vector<16x64xf32>
    %3 = arith.maximumf %1, %2 : vector<16x64xf32>
    %4 = arith.truncf %3 : vector<16x64xf32> to vector<16x64xbf16>
    %c1 = arith.constant 1 : index
    %c0_2 = arith.constant 0 : index
    %c0_3 = arith.constant 0 : index
    %5 = vector.load %arg2[%c1, %c0_2, %c0_3] : memref<3x64x128xbf16, #tpu.memory_space<vmem>>, vector<1x64x128xbf16>
    %6 = vector.shape_cast %5 : vector<1x64x128xbf16> to vector<64x128xbf16>
    %cst_4 = arith.constant dense<0.000000e+00> : vector<16x128xf32>
    %7 = tpu.matmul %4, %6, %cst_4 {dimension_numbers = #tpu.dot_dimension_numbers<[1], [0], [0], [1], [0, 0, 1, 1], [], []>} : vector<16x64xbf16>, vector<64x128xbf16>, vector<16x128xf32> -> vector<16x128xf32>
    %c0_5 = arith.constant 0 : index
    %c0_6 = arith.constant 0 : index
    %8 = vector.load %arg9[%c0_5, %c0_6] : memref<16x128xf32, #tpu.memory_space<vmem>>, vector<16x128xf32>
    tpu.vector_store %arg9[%c0_5, %c0_6], %7 {strides = array<i32>} : memref<16x128xf32, #tpu.memory_space<vmem>>, vector<16x128xf32>,
    %9 = vector.extract_strided_slice %4 {offsets = [0, 0], sizes = [15, 64], strides = [1, 1]} : vector<16x64xbf16> to vector<15x64xbf16>
    %c0_7 = arith.constant 0 : index
    %c0_8 = arith.constant 0 : index
    %c0_9 = arith.constant 0 : index
    %10 = vector.load %arg2[%c0_7, %c0_8, %c0_9] : memref<3x64x128xbf16, #tpu.memory_space<vmem>>, vector<1x64x128xbf16>
    %11 = vector.shape_cast %10 : vector<1x64x128xbf16> to vector<64x128xbf16>
    %cst_10 = arith.constant dense<0.000000e+00> : vector<15x128xf32>
    %12 = tpu.matmul %9, %11, %cst_10 {dimension_numbers = #tpu.dot_dimension_numbers<[1], [0], [0], [1], [0, 0, 1, 1], [], []>} : vector<15x64xbf16>, vector<64x128xbf16>, vector<15x128xf32> -> vector<15x128xf32>
    %c1_11 = arith.constant 1 : index
    %c0_12 = arith.constant 0 : index
    %13 = vector.load %arg9[%c1_11, %c0_12] : memref<16x128xf32, #tpu.memory_space<vmem>>, vector<15x128xf32>
    %14 = arith.addf %13, %12 : vector<15x128xf32>
    %c1_13 = arith.constant 1 : index
    %c0_14 = arith.constant 0 : index
    %15 = vector.load %arg9[%c1_13, %c0_14] : memref<16x128xf32, #tpu.memory_space<vmem>>, vector<15x128xf32>
    tpu.vector_store %arg9[%c1_13, %c0_14], %14 {strides = array<i32>} : memref<16x128xf32, #tpu.memory_space<vmem>>, vector<15x128xf32>,
    %16 = vector.extract_strided_slice %4 {offsets = [1, 0], sizes = [15, 64], strides = [1, 1]} : vector<16x64xbf16> to vector<15x64xbf16>
    %c2 = arith.constant 2 : index
    %c0_15 = arith.constant 0 : index
    %c0_16 = arith.constant 0 : index
    %17 = vector.load %arg2[%c2, %c0_15, %c0_16] : memref<3x64x128xbf16, #tpu.memory_space<vmem>>, vector<1x64x128xbf16>
    %18 = vector.shape_cast %17 : vector<1x64x128xbf16> to vector<64x128xbf16>
    %cst_17 = arith.constant dense<0.000000e+00> : vector<15x128xf32>
    %19 = tpu.matmul %16, %18, %cst_17 {dimension_numbers = #tpu.dot_dimension_numbers<[1], [0], [0], [1], [0, 0, 1, 1], [], []>} : vector<15x64xbf16>, vector<64x128xbf16>, vector<15x128xf32> -> vector<15x128xf32>
    %c0_18 = arith.constant 0 : index
    %c0_19 = arith.constant 0 : index
    %20 = vector.load %arg9[%c0_18, %c0_19] : memref<16x128xf32, #tpu.memory_space<vmem>>, vector<15x128xf32>
    %21 = arith.addf %20, %19 : vector<15x128xf32>
    %c0_20 = arith.constant 0 : index
    %c0_21 = arith.constant 0 : index
    %22 = vector.load %arg9[%c0_20, %c0_21] : memref<16x128xf32, #tpu.memory_space<vmem>>, vector<15x128xf32>
    tpu.vector_store %arg9[%c0_20, %c0_21], %21 {strides = array<i32>} : memref<16x128xf32, #tpu.memory_space<vmem>>, vector<15x128xf32>,
    %c0_22 = arith.constant 0 : index
    %c0_23 = arith.constant 0 : index
    %23 = vector.load %arg9[%c0_22, %c0_23] : memref<16x128xf32, #tpu.memory_space<vmem>>, vector<16x128xf32>
    %c0_24 = arith.constant 0 : index
    %c0_25 = arith.constant 0 : index
    %24 = vector.load %arg3[%c0_24, %c0_25] : memref<1x128xf32, #tpu.memory_space<vmem>>, vector<1x128xf32>
    %25 = vector.broadcast %24 : vector<1x128xf32> to vector<16x128xf32>
    %26 = arith.addf %23, %25 : vector<16x128xf32>
    %cst_26 = arith.constant 0.000000e+00 : f32
    %27 = vector.broadcast %cst_26 : f32 to vector<16x128xf32>
    %28 = arith.maximumf %26, %27 : vector<16x128xf32>
    %29 = arith.truncf %28 : vector<16x128xf32> to vector<16x128xbf16>
    %c1_27 = arith.constant 1 : index
    %c0_28 = arith.constant 0 : index
    %c0_29 = arith.constant 0 : index
    %30 = vector.load %arg4[%c1_27, %c0_28, %c0_29] : memref<3x128x128xbf16, #tpu.memory_space<vmem>>, vector<1x128x128xbf16>
    %31 = vector.shape_cast %30 : vector<1x128x128xbf16> to vector<128x128xbf16>
    %cst_30 = arith.constant dense<0.000000e+00> : vector<16x128xf32>
    %32 = tpu.matmul %29, %31, %cst_30 {dimension_numbers = #tpu.dot_dimension_numbers<[1], [0], [0], [1], [0, 0, 1, 1], [], []>} : vector<16x128xbf16>, vector<128x128xbf16>, vector<16x128xf32> -> vector<16x128xf32>
    %c0_31 = arith.constant 0 : index
    %c0_32 = arith.constant 0 : index
    %33 = vector.load %arg9[%c0_31, %c0_32] : memref<16x128xf32, #tpu.memory_space<vmem>>, vector<16x128xf32>
    tpu.vector_store %arg9[%c0_31, %c0_32], %32 {strides = array<i32>} : memref<16x128xf32, #tpu.memory_space<vmem>>, vector<16x128xf32>,
    %34 = vector.extract_strided_slice %29 {offsets = [0, 0], sizes = [15, 128], strides = [1, 1]} : vector<16x128xbf16> to vector<15x128xbf16>
    %c0_33 = arith.constant 0 : index
    %c0_34 = arith.constant 0 : index
    %c0_35 = arith.constant 0 : index
    %35 = vector.load %arg4[%c0_33, %c0_34, %c0_35] : memref<3x128x128xbf16, #tpu.memory_space<vmem>>, vector<1x128x128xbf16>
    %36 = vector.shape_cast %35 : vector<1x128x128xbf16> to vector<128x128xbf16>
    %cst_36 = arith.constant dense<0.000000e+00> : vector<15x128xf32>
    %37 = tpu.matmul %34, %36, %cst_36 {dimension_numbers = #tpu.dot_dimension_numbers<[1], [0], [0], [1], [0, 0, 1, 1], [], []>} : vector<15x128xbf16>, vector<128x128xbf16>, vector<15x128xf32> -> vector<15x128xf32>
    %c1_37 = arith.constant 1 : index
    %c0_38 = arith.constant 0 : index
    %38 = vector.load %arg9[%c1_37, %c0_38] : memref<16x128xf32, #tpu.memory_space<vmem>>, vector<15x128xf32>
    %39 = arith.addf %38, %37 : vector<15x128xf32>
    %c1_39 = arith.constant 1 : index
    %c0_40 = arith.constant 0 : index
    %40 = vector.load %arg9[%c1_39, %c0_40] : memref<16x128xf32, #tpu.memory_space<vmem>>, vector<15x128xf32>
    tpu.vector_store %arg9[%c1_39, %c0_40], %39 {strides = array<i32>} : memref<16x128xf32, #tpu.memory_space<vmem>>, vector<15x128xf32>,
    %41 = vector.extract_strided_slice %29 {offsets = [1, 0], sizes = [15, 128], strides = [1, 1]} : vector<16x128xbf16> to vector<15x128xbf16>
    %c2_41 = arith.constant 2 : index
    %c0_42 = arith.constant 0 : index
    %c0_43 = arith.constant 0 : index
    %42 = vector.load %arg4[%c2_41, %c0_42, %c0_43] : memref<3x128x128xbf16, #tpu.memory_space<vmem>>, vector<1x128x128xbf16>
    %43 = vector.shape_cast %42 : vector<1x128x128xbf16> to vector<128x128xbf16>
    %cst_44 = arith.constant dense<0.000000e+00> : vector<15x128xf32>
    %44 = tpu.matmul %41, %43, %cst_44 {dimension_numbers = #tpu.dot_dimension_numbers<[1], [0], [0], [1], [0, 0, 1, 1], [], []>} : vector<15x128xbf16>, vector<128x128xbf16>, vector<15x128xf32> -> vector<15x128xf32>
    %c0_45 = arith.constant 0 : index
    %c0_46 = arith.constant 0 : index
    %45 = vector.load %arg9[%c0_45, %c0_46] : memref<16x128xf32, #tpu.memory_space<vmem>>, vector<15x128xf32>
    %46 = arith.addf %45, %44 : vector<15x128xf32>
    %c0_47 = arith.constant 0 : index
    %c0_48 = arith.constant 0 : index
    %47 = vector.load %arg9[%c0_47, %c0_48] : memref<16x128xf32, #tpu.memory_space<vmem>>, vector<15x128xf32>
    tpu.vector_store %arg9[%c0_47, %c0_48], %46 {strides = array<i32>} : memref<16x128xf32, #tpu.memory_space<vmem>>, vector<15x128xf32>,
    %c0_49 = arith.constant 0 : index
    %c0_50 = arith.constant 0 : index
    %48 = vector.load %arg9[%c0_49, %c0_50] : memref<16x128xf32, #tpu.memory_space<vmem>>, vector<16x128xf32>
    %c0_51 = arith.constant 0 : index
    %c0_52 = arith.constant 0 : index
    %49 = vector.load %arg5[%c0_51, %c0_52] : memref<1x128xf32, #tpu.memory_space<vmem>>, vector<1x128xf32>
    %50 = vector.broadcast %49 : vector<1x128xf32> to vector<16x128xf32>
    %51 = arith.addf %48, %50 : vector<16x128xf32>
    %52 = arith.truncf %1 : vector<16x64xf32> to vector<16x64xbf16>
    %c0_53 = arith.constant 0 : index
    %c0_54 = arith.constant 0 : index
    %53 = vector.load %arg6[%c0_53, %c0_54] : memref<64x128xbf16, #tpu.memory_space<vmem>>, vector<64x128xbf16>
    %cst_55 = arith.constant dense<0.000000e+00> : vector<16x128xf32>
    %54 = tpu.matmul %52, %53, %cst_55 {dimension_numbers = #tpu.dot_dimension_numbers<[1], [0], [0], [1], [0, 0, 1, 1], [], []>} : vector<16x64xbf16>, vector<64x128xbf16>, vector<16x128xf32> -> vector<16x128xf32>
    %c0_56 = arith.constant 0 : index
    %c0_57 = arith.constant 0 : index
    %55 = vector.load %arg7[%c0_56, %c0_57] : memref<1x128xf32, #tpu.memory_space<vmem>>, vector<1x128xf32>
    %56 = vector.broadcast %55 : vector<1x128xf32> to vector<16x128xf32>
    %57 = arith.addf %54, %56 : vector<16x128xf32>
    %58 = arith.addf %57, %51 : vector<16x128xf32>
    %c0_58 = arith.constant 0 : index
    %c0_59 = arith.constant 0 : index
    %c0_60 = arith.constant 0 : index
    %59 = vector.load %arg8[%c0_58, %c0_59, %c0_60] : memref<1x16x128xf32, #tpu.memory_space<vmem>>, vector<1x16x128xf32>
    %60 = vector.shape_cast %59 : vector<1x16x128xf32> to vector<16x128xf32>
    %61 = vector.shape_cast %58 : vector<16x128xf32> to vector<1x16x128xf32>
    tpu.vector_store %arg8[%c0_58, %c0_59, %c0_60], %61 {strides = array<i32>} : memref<1x16x128xf32, #tpu.memory_space<vmem>>, vector<1x16x128xf32>,
    return
  }
  func.func @transform_0(%arg0: i32) -> (i32, i32, i32) {
    %c0_i32 = arith.constant 0 : i32
    %c0_i32_0 = arith.constant 0 : i32
    %c0_i32_1 = arith.constant 0 : i32
    return %arg0, %c0_i32, %c0_i32_0 : i32, i32, i32
  }
  func.func @transform_1(%arg0: i32) -> (i32, i32, i32) {
    %c0_i32 = arith.constant 0 : i32
    %c0_i32_0 = arith.constant 0 : i32
    %c0_i32_1 = arith.constant 0 : i32
    %c0_i32_2 = arith.constant 0 : i32
    return %c0_i32, %c0_i32_0, %c0_i32_1 : i32, i32, i32
  }
  func.func @transform_2(%arg0: i32) -> (i32, i32) {
    %c0_i32 = arith.constant 0 : i32
    %c0_i32_0 = arith.constant 0 : i32
    %c0_i32_1 = arith.constant 0 : i32
    return %c0_i32, %c0_i32_0 : i32, i32
  }
  func.func @transform_3(%arg0: i32) -> (i32, i32, i32) {
    %c0_i32 = arith.constant 0 : i32
    %c0_i32_0 = arith.constant 0 : i32
    %c0_i32_1 = arith.constant 0 : i32
    %c0_i32_2 = arith.constant 0 : i32
    return %c0_i32, %c0_i32_0, %c0_i32_1 : i32, i32, i32
  }
  func.func @transform_4(%arg0: i32) -> (i32, i32) {
    %c0_i32 = arith.constant 0 : i32
    %c0_i32_0 = arith.constant 0 : i32
    %c0_i32_1 = arith.constant 0 : i32
    return %c0_i32, %c0_i32_0 : i32, i32
  }
  func.func @transform_5(%arg0: i32) -> (i32, i32) {
    %c0_i32 = arith.constant 0 : i32
    %c0_i32_0 = arith.constant 0 : i32
    %c0_i32_1 = arith.constant 0 : i32
    return %c0_i32, %c0_i32_0 : i32, i32
  }
  func.func @transform_6(%arg0: i32) -> (i32, i32) {
    %c0_i32 = arith.constant 0 : i32
    %c0_i32_0 = arith.constant 0 : i32
    %c0_i32_1 = arith.constant 0 : i32
    return %c0_i32, %c0_i32_0 : i32, i32
  }
  func.func @transform_7(%arg0: i32) -> (i32, i32, i32) {
    %c0_i32 = arith.constant 0 : i32
    %c0_i32_0 = arith.constant 0 : i32
    %c0_i32_1 = arith.constant 0 : i32
    return %arg0, %c0_i32, %c0_i32_0 : i32, i32, i32
  }
}

</mosaic_0001>

<llo_original>
// kernel: tpu_custom_call.1
$region0: #{tpu_custom_call.1}
  #allocation0 [shape = 'u32[]', space=smem, size = 0x4, offset = 0x4, fixed_abs, tag = 'smem constant byte address 0x4 - core index']
  #allocation1 [shape = 'u32[144,128]{1,0:T(1,128)}', space=vmem, size = 0x12000, scoped, tag = 'internal scratch']
  #allocation2 [shape = 'f32[16,128]{1,0:T(8,128)}', space=vmem, size = 0x2000, scoped, tag = 'scratch operand']
  %s0 = inlined_call_operand.hbm [shape: f32[2,16,64], index: 0, kind: input, shape index: {}]
  %s1 = inlined_call_operand.hbm [shape: bf16[3,64,128], index: 1, kind: input, shape index: {}]
  %s2 = inlined_call_operand.vmem [shape: f32[1,128], index: 2, kind: input, shape index: {}]
  %s3 = inlined_call_operand.hbm [shape: bf16[3,128,128], index: 3, kind: input, shape index: {}]
  %s4 = inlined_call_operand.vmem [shape: f32[1,128], index: 4, kind: input, shape index: {}]
  %s5 = inlined_call_operand.hbm [shape: bf16[64,128], index: 5, kind: input, shape index: {}]
  %s6 = inlined_call_operand.vmem [shape: f32[1,128], index: 6, kind: input, shape index: {}]
  %s7 = inlined_call_operand.hbm [shape: f32[2,16,128], index: 7, kind: output, shape index: {}]
  %s8 = sld [smem:[#allocation0]]
  $region77: #{tpu_custom_call.1} parent=0
    _
  %s10 = ssub.s32 1, %s8
  %s11 = scalar_select 0, %s10, %s8
  $region1: #{tpu_custom_call.1} parent=0
    #allocation3 [shape = 'u8[16384]{0}', space=vmem, size = 0x4000, scoped, tag = 'input window, operand 0']
    #allocation4 [shape = 's32[2]{0}', space=sflag, size = 0x8, scoped, tag = 'scoped memory for tpu_custom_call.1']
    #allocation5 [shape = 's32[2]{0}', space=sflag, size = 0x8, scoped, tag = 'scoped memory for tpu_custom_call.1']
    #allocation6 [shape = 'u8[49152]{0}', space=vmem, size = 0xc000, scoped, tag = 'input window, operand 1, single buffered']
    #allocation7 [shape = 's32[1]{0}', space=sflag, size = 0x4, scoped, tag = 'scoped memory for tpu_custom_call.1']
    #allocation8 [shape = 'u8[98304]{0}', space=vmem, size = 0x18000, scoped, tag = 'input window, operand 3, single buffered']
    #allocation9 [shape = 'u8[16384]{0}', space=vmem, size = 0x4000, scoped, tag = 'input window, operand 5, single buffered']
    #allocation10 [shape = 's32[1]{0}', space=sflag, size = 0x4, scoped, tag = 'scoped memory for tpu_custom_call.1']
    #allocation11 [shape = 'u8[16384]{0}', space=vmem, size = 0x4000, scoped, tag = 'output window, operand 0']
    %12 = vsyncpa [#allocation4], 0
    %s13 = scalar_lea.sflag [#allocation4], 1
    %14 = vsyncpa %s13, 0
    %15 = vsyncpa [#allocation7], 0
    %16 = vsyncpa [#allocation10], 0
    %17 = vsyncpa [#allocation5], 0
    %s18 = scalar_lea.sflag [#allocation5], 1
    %19 = vsyncpa %s18, 0
    loop: start=0, step=1, limit=4
    $region2: #{tpu_custom_call.1} parent=1 // loop_pre_header
      _
    $region3: #{tpu_custom_call.1} parent=1 // loop_header
      %s21 = sphi 0, %s25
      %p22 = scmp.ge.s32.totalorder %s21, 4
      %s31 = sphi 0, %s33
      %s34 = sphi 0, %s31
      %s35 = sphi 0, %s34
      %s51 = sphi 0, %s35
      %s55 = sphi 0, %s55
      %s57 = sphi 0, %s55
      %s58 = sphi 0, %s57
      %s72 = sphi 0, %s58
      %s76 = sphi 0, %s76
      %s78 = sphi 0, %s76
      %s79 = sphi 0, %s78
      %s93 = sphi 0, %s79
      %s97 = sphi 0, %s97
      %s99 = sphi 0, %s97
      %s100 = sphi 0, %s99
      %s114 = sphi 0, %s100
      %s118 = sphi 0, %s118
      %s120 = sphi 0, %s118
      %s121 = sphi 0, %s120
      %s135 = sphi 0, %s121
      %s139 = sphi 0, %s139
      %s141 = sphi 0, %s139
      %s142 = sphi 0, %s141
      %s156 = sphi 0, %s142
      %s160 = sphi 0, %s160
      %s162 = sphi 0, %s160
      %s163 = sphi 0, %s162
      %s177 = sphi 0, %s163
      %s183 = sphi 0, %s185
      %s186 = sphi 0, %s183
      %s187 = sphi 0, %s186
      %s203 = sphi 0, %s187
    $region4: #{tpu_custom_call.1} parent=1 // loop_header_branch
      %24 = sbr.rel (%p22) target = $region8
    $region5: #{tpu_custom_call.1} parent=1 // loop_body
      %s26 = ssub.s32 %s21, 1
      %s27 = ssub.s32 %s21, 2
      %s28 = sadd.s32 %s21, 1
      %s29 = ssub.s32 %s21, %s28
      %p30 = scmp.eq.s32.totalorder %s29, 0
      %s32 = sadd.s32 %s31, 1
      %s33 = scalar_select %p30, %s31, %s32
      %p36 = pneg %p30
      %p37 = scmp.eq.s32.totalorder %s21, 1
      %p38 = por %p36, %p37
      %p39 = scmp.ne.s32.totalorder %s31, %s34
      %p40 = scmp.eq.s32.totalorder %s21, 0
      %p41 = por %p39, %p40
      %p42 = scmp.ne.s32.totalorder %s31, %s34
      %p43 = scmp.eq.s32.totalorder %s26, 1
      %p44 = por %p42, %p43
      %p45 = scmp.ne.s32.totalorder %s34, %s35
      %p46 = scmp.eq.s32.totalorder %s26, 0
      %p47 = por %p45, %p46
      %p48 = scmp.ne.s32.totalorder %s34, %s35
      %p49 = scmp.eq.s32.totalorder %s27, 1
      %p50 = por %p48, %p49
      %p52 = scmp.ne.s32.totalorder %s35, %s51
      %p53 = scmp.eq.s32.totalorder %s27, 0
      %p54 = por %p52, %p53
      %s56 = sadd.s32 %s55, 1
      %p59 = scmp.eq.s32.totalorder %s21, 1
      %p60 = scmp.ne.s32.totalorder %s55, %s57
      %p61 = scmp.eq.s32.totalorder %s21, 0
      %p62 = por %p60, %p61
      %p63 = scmp.ne.s32.totalorder %s55, %s57
      %p64 = scmp.eq.s32.totalorder %s26, 1
      %p65 = por %p63, %p64
      %p66 = scmp.ne.s32.totalorder %s57, %s58
      %p67 = scmp.eq.s32.totalorder %s26, 0
      %p68 = por %p66, %p67
      %p69 = scmp.ne.s32.totalorder %s57, %s58
      %p70 = scmp.eq.s32.totalorder %s27, 1
      %p71 = por %p69, %p70
      %p73 = scmp.ne.s32.totalorder %s58, %s72
      %p74 = scmp.eq.s32.totalorder %s27, 0
      %p75 = por %p73, %p74
      %s77 = sadd.s32 %s76, 1
      %p80 = scmp.eq.s32.totalorder %s21, 1
      %p81 = scmp.ne.s32.totalorder %s76, %s78
      %p82 = scmp.eq.s32.totalorder %s21, 0
      %p83 = por %p81, %p82
      %p84 = scmp.ne.s32.totalorder %s76, %s78
      %p85 = scmp.eq.s32.totalorder %s26, 1
      %p86 = por %p84, %p85
      %p87 = scmp.ne.s32.totalorder %s78, %s79
      %p88 = scmp.eq.s32.totalorder %s26, 0
      %p89 = por %p87, %p88
      %p90 = scmp.ne.s32.totalorder %s78, %s79
      %p91 = scmp.eq.s32.totalorder %s27, 1
      %p92 = por %p90, %p91
      %p94 = scmp.ne.s32.totalorder %s79, %s93
      %p95 = scmp.eq.s32.totalorder %s27, 0
      %p96 = por %p94, %p95
      %s98 = sadd.s32 %s97, 1
      %p101 = scmp.eq.s32.totalorder %s21, 1
      %p102 = scmp.ne.s32.totalorder %s97, %s99
      %p103 = scmp.eq.s32.totalorder %s21, 0
      %p104 = por %p102, %p103
      %p105 = scmp.ne.s32.totalorder %s97, %s99
      %p106 = scmp.eq.s32.totalorder %s26, 1
      %p107 = por %p105, %p106
      %p108 = scmp.ne.s32.totalorder %s99, %s100
      %p109 = scmp.eq.s32.totalorder %s26, 0
      %p110 = por %p108, %p109
      %p111 = scmp.ne.s32.totalorder %s99, %s100
      %p112 = scmp.eq.s32.totalorder %s27, 1
      %p113 = por %p111, %p112
      %p115 = scmp.ne.s32.totalorder %s100, %s114
      %p116 = scmp.eq.s32.totalorder %s27, 0
      %p117 = por %p115, %p116
      %s119 = sadd.s32 %s118, 1
      %p122 = scmp.eq.s32.totalorder %s21, 1
      %p123 = scmp.ne.s32.totalorder %s118, %s120
      %p124 = scmp.eq.s32.totalorder %s21, 0
      %p125 = por %p123, %p124
      %p126 = scmp.ne.s32.totalorder %s118, %s120
      %p127 = scmp.eq.s32.totalorder %s26, 1
      %p128 = por %p126, %p127
      %p129 = scmp.ne.s32.totalorder %s120, %s121
      %p130 = scmp.eq.s32.totalorder %s26, 0
      %p131 = por %p129, %p130
      %p132 = scmp.ne.s32.totalorder %s120, %s121
      %p133 = scmp.eq.s32.totalorder %s27, 1
      %p134 = por %p132, %p133
      %p136 = scmp.ne.s32.totalorder %s121, %s135
      %p137 = scmp.eq.s32.totalorder %s27, 0
      %p138 = por %p136, %p137
      %s140 = sadd.s32 %s139, 1
      %p143 = scmp.eq.s32.totalorder %s21, 1
      %p144 = scmp.ne.s32.totalorder %s139, %s141
      %p145 = scmp.eq.s32.totalorder %s21, 0
      %p146 = por %p144, %p145
      %p147 = scmp.ne.s32.totalorder %s139, %s141
      %p148 = scmp.eq.s32.totalorder %s26, 1
      %p149 = por %p147, %p148
      %p150 = scmp.ne.s32.totalorder %s141, %s142
      %p151 = scmp.eq.s32.totalorder %s26, 0
      %p152 = por %p150, %p151
      %p153 = scmp.ne.s32.totalorder %s141, %s142
      %p154 = scmp.eq.s32.totalorder %s27, 1
      %p155 = por %p153, %p154
      %p157 = scmp.ne.s32.totalorder %s142, %s156
      %p158 = scmp.eq.s32.totalorder %s27, 0
      %p159 = por %p157, %p158
      %s161 = sadd.s32 %s160, 1
      %p164 = scmp.eq.s32.totalorder %s21, 1
      %p165 = scmp.ne.s32.totalorder %s160, %s162
      %p166 = scmp.eq.s32.totalorder %s21, 0
      %p167 = por %p165, %p166
      %p168 = scmp.ne.s32.totalorder %s160, %s162
      %p169 = scmp.eq.s32.totalorder %s26, 1
      %p170 = por %p168, %p169
      %p171 = scmp.ne.s32.totalorder %s162, %s163
      %p172 = scmp.eq.s32.totalorder %s26, 0
      %p173 = por %p171, %p172
      %p174 = scmp.ne.s32.totalorder %s162, %s163
      %p175 = scmp.eq.s32.totalorder %s27, 1
      %p176 = por %p174, %p175
      %p178 = scmp.ne.s32.totalorder %s163, %s177
      %p179 = scmp.eq.s32.totalorder %s27, 0
      %p180 = por %p178, %p179
      %s181 = ssub.s32 %s21, %s28
      %p182 = scmp.eq.s32.totalorder %s181, 0
      %s184 = sadd.s32 %s183, 1
      %s185 = scalar_select %p182, %s183, %s184
      %p188 = pneg %p182
      %p189 = scmp.eq.s32.totalorder %s21, 1
      %p190 = por %p188, %p189
      %p191 = scmp.ne.s32.totalorder %s183, %s186
      %p192 = scmp.eq.s32.totalorder %s21, 0
      %p193 = por %p191, %p192
      %p194 = scmp.ne.s32.totalorder %s183, %s186
      %p195 = scmp.eq.s32.totalorder %s26, 1
      %p196 = por %p194, %p195
      %p197 = scmp.ne.s32.totalorder %s186, %s187
      %p198 = scmp.eq.s32.totalorder %s26, 0
      %p199 = por %p197, %p198
      %p200 = scmp.ne.s32.totalorder %s186, %s187
      %p201 = scmp.eq.s32.totalorder %s27, 1
      %p202 = por %p200, %p201
      %p204 = scmp.ne.s32.totalorder %s187, %s203
      %p205 = scmp.eq.s32.totalorder %s27, 0
      %p206 = por %p204, %p205
      %p207 = scmp.le.s32.totalorder 1, %s21
      %p208 = scmp.lt.s32.totalorder %s21, 3
      %p209 = pnand %p207, %p208
      %p210 = pneg %p209
      // Predicated region
      $region9: #{tpu_custom_call.1} parent=5 // pred_check
        _
      $region10: #{tpu_custom_call.1} parent=5 // pred_check_branch
        %212 = sbr.rel (%p209) target = $region12
      $region11: #{tpu_custom_call.1} parent=5 // pred_region
        %s213 = ssub.s32 %s21, 1
        // Predicated region
        $region13: #{tpu_custom_call.1} parent=11 // pred_check
          %p214 = pneg %p68
        $region14: #{tpu_custom_call.1} parent=11 // pred_check_branch
          %216 = sbr.rel (%p214) target = $region16
        $region15: #{tpu_custom_call.1} parent=11 // pred_region
          %s218 = ssub.s32 1536, 1536
          %219 = vsyncadd [#allocation7], %s218
          %s220 = sshll.u32 [#allocation6], 4
          %s221 = int_to_ptr.vmem [resolvable:$true] %s220
          %226 = dma.hbm_to_vmem [thread:$0]  %s1, 1536, %s221, [#allocation7], 64, 64, 4
        $region16: #{tpu_custom_call.1} parent=11 // pred_fallthru
          _
        // Predicated region
        $region17: #{tpu_custom_call.1} parent=11 // pred_check
          %p227 = pneg %p89
        $region18: #{tpu_custom_call.1} parent=11 // pred_check_branch
          %229 = sbr.rel (%p227) target = $region20
        $region19: #{tpu_custom_call.1} parent=11 // pred_region
          _
        $region20: #{tpu_custom_call.1} parent=11 // pred_fallthru
          _
        // Predicated region
        $region21: #{tpu_custom_call.1} parent=11 // pred_check
          %p230 = pneg %p110
        $region22: #{tpu_custom_call.1} parent=11 // pred_check_branch
          %232 = sbr.rel (%p230) target = $region24
        $region23: #{tpu_custom_call.1} parent=11 // pred_region
          %s234 = ssub.s32 3072, 3072
          %235 = vsyncadd [#allocation7], %s234
          %s236 = sshll.u32 [#allocation8], 4
          %s237 = int_to_ptr.vmem [resolvable:$true] %s236
          %242 = dma.hbm_to_vmem [thread:$0]  %s3, 3072, %s237, [#allocation7], 64, 64, 4
        $region24: #{tpu_custom_call.1} parent=11 // pred_fallthru
          _
        // Predicated region
        $region25: #{tpu_custom_call.1} parent=11 // pred_check
          %p243 = pneg %p131
        $region26: #{tpu_custom_call.1} parent=11 // pred_check_branch
          %245 = sbr.rel (%p243) target = $region28
        $region27: #{tpu_custom_call.1} parent=11 // pred_region
          _
        $region28: #{tpu_custom_call.1} parent=11 // pred_fallthru
          _
        // Predicated region
        $region29: #{tpu_custom_call.1} parent=11 // pred_check
          %p246 = pneg %p152
        $region30: #{tpu_custom_call.1} parent=11 // pred_check_branch
          %248 = sbr.rel (%p246) target = $region32
        $region31: #{tpu_custom_call.1} parent=11 // pred_region
          %s250 = ssub.s32 512, 512
          %251 = vsyncadd [#allocation10], %s250
          %s252 = sshll.u32 [#allocation9], 4
          %s253 = int_to_ptr.vmem [resolvable:$true] %s252
          %258 = dma.hbm_to_vmem [thread:$0]  %s5, 512, %s253, [#allocation10], 64, 64, 4
        $region32: #{tpu_custom_call.1} parent=11 // pred_fallthru
          _
        // Predicated region
        $region33: #{tpu_custom_call.1} parent=11 // pred_check
          %p259 = pneg %p173
        $region34: #{tpu_custom_call.1} parent=11 // pred_check_branch
          %261 = sbr.rel (%p259) target = $region36
        $region35: #{tpu_custom_call.1} parent=11 // pred_region
          _
        $region36: #{tpu_custom_call.1} parent=11 // pred_fallthru
          _
      $region12: #{tpu_custom_call.1} parent=5 // pred_fallthru
        _
      %p262 = scmp.lt.s32.totalorder %s21, 2
      // Predicated region
      $region37: #{tpu_custom_call.1} parent=5 // pred_check
        %p263 = pneg %p262
      $region38: #{tpu_custom_call.1} parent=5 // pred_check_branch
        %265 = sbr.rel (%p263) target = $region40
      $region39: #{tpu_custom_call.1} parent=5 // pred_region
        // Predicated region
        $region41: #{tpu_custom_call.1} parent=39 // pred_check
          %p266 = pneg %p41
        $region42: #{tpu_custom_call.1} parent=39 // pred_check_branch
          %268 = sbr.rel (%p266) target = $region44
        $region43: #{tpu_custom_call.1} parent=39 // pred_region
          %s269 = sand.u32 %s31, 1
          %s270 = scalar_lea.sflag [#allocation4], %s269
          %s271 = sand.u32 %s31, 1
          %s272 = smul.addr %s271, 16
          %s273 = scalar_lea.vmem [#allocation3], %s272
          %s275 = ssub.s32 256, 256
          %276 = vsyncadd %s270, %s275
          %s277 = smul.addr %s21, 2
          %s278 = smul.addr %s277, 128
          %s279 = scalar_lea.hbm %s0, %s278
          %s280 = sshll.u32 %s273, 4
          %s281 = int_to_ptr.vmem [resolvable:$true] %s280
          %286 = dma.hbm_to_vmem [thread:$0]  %s279, 256, %s281, %s270, 128, 128, 8
        $region44: #{tpu_custom_call.1} parent=39 // pred_fallthru
          _
      $region40: #{tpu_custom_call.1} parent=5 // pred_fallthru
        _
      %p287 = scmp.le.s32.totalorder 1, %s21
      %p288 = scmp.lt.s32.totalorder %s21, 3
      %p289 = pnand %p287, %p288
      %p290 = pneg %p289
      // Predicated region
      $region45: #{tpu_custom_call.1} parent=5 // pred_check
        _
      $region46: #{tpu_custom_call.1} parent=5 // pred_check_branch
        %292 = sbr.rel (%p289) target = $region48
      $region47: #{tpu_custom_call.1} parent=5 // pred_region
        %s293 = ssub.s32 %s21, 1
        %s294 = sand.u32 %s34, 1
        %s295 = scalar_lea.sflag [#allocation4], %s294
        %s296 = sand.u32 %s34, 1
        %s297 = smul.addr %s296, 16
        %s298 = scalar_lea.vmem [#allocation3], %s297
        // Predicated region
        $region49: #{tpu_custom_call.1} parent=47 // pred_check
          %p299 = pneg %p47
        $region50: #{tpu_custom_call.1} parent=47 // pred_check_branch
          %301 = sbr.rel (%p299) target = $region52
        $region51: #{tpu_custom_call.1} parent=47 // pred_region
          %302 = dma.done %s295, 256
        $region52: #{tpu_custom_call.1} parent=47 // pred_fallthru
          _
        // Predicated region
        $region53: #{tpu_custom_call.1} parent=47 // pred_check
          %p303 = pneg %p68
        $region54: #{tpu_custom_call.1} parent=47 // pred_check_branch
          %305 = sbr.rel (%p303) target = $region56
        $region55: #{tpu_custom_call.1} parent=47 // pred_region
          %306 = dma.done [#allocation7], 1536
        $region56: #{tpu_custom_call.1} parent=47 // pred_fallthru
          _
        // Predicated region
        $region57: #{tpu_custom_call.1} parent=47 // pred_check
          %p307 = pneg %p110
        $region58: #{tpu_custom_call.1} parent=47 // pred_check_branch
          %309 = sbr.rel (%p307) target = $region60
        $region59: #{tpu_custom_call.1} parent=47 // pred_region
          %310 = dma.done [#allocation7], 3072
        $region60: #{tpu_custom_call.1} parent=47 // pred_fallthru
          _
        // Predicated region
        $region61: #{tpu_custom_call.1} parent=47 // pred_check
          %p311 = pneg %p152
        $region62: #{tpu_custom_call.1} parent=47 // pred_check_branch
          %313 = sbr.rel (%p311) target = $region64
        $region63: #{tpu_custom_call.1} parent=47 // pred_region
          %314 = dma.done [#allocation10], 512
        $region64: #{tpu_custom_call.1} parent=47 // pred_fallthru
          _
        %s315 = sand.u32 %s34, 1
        %s316 = scalar_lea.sflag [#allocation4], %s315
        %s317 = sand.u32 %s34, 1
        %s318 = smul.addr %s317, 16
        %s319 = scalar_lea.vmem [#allocation3], %s318
        %p320 = pneg %p47
        %p321 = pneg %p44
        %p322 = pneg %p68
        %p323 = pneg %p65
        %p324 = pneg %p89
        %p325 = pneg %p86
        %p326 = pneg %p110
        %p327 = pneg %p107
        %p328 = pneg %p131
        %p329 = pneg %p128
        %p330 = pneg %p152
        %p331 = pneg %p149
        %p332 = pneg %p173
        %p333 = pneg %p170
        %p334 = pneg %p199
        %p335 = pneg %p196
        %s336 = sand.u32 %s186, 1
        %s337 = scalar_lea.sflag [#allocation5], %s336
        %s338 = sand.u32 %s186, 1
        %s339 = smul.addr %s338, 16
        %s340 = scalar_lea.vmem [#allocation11], %s339
        %v342 = vld [vmem:[%s298] sm:$0xff]
        %v343 = vld [vmem:[%s298 + $0x8] sm:$0xff]
        %v344 = vmax.f32 %v342, 0.0
        %v345 = vmax.f32 %v343, 0.0
        %v346 = vpack.c.bf16 %v345, %v344
        %s347 = scalar_lea.vmem [#allocation6], 32
        %v348 = vld [vmem:[%s347] sm:$0xf]
        %v349 = vld [vmem:[%s347 + $0x4] sm:$0xf]
        %v350 = vld [vmem:[%s347 + $0x8] sm:$0xf]
        %v351 = vld [vmem:[%s347 + $0xc] sm:$0xf]
        %v352 = vld [vmem:[%s347 + $0x10] sm:$0xf]
        %v353 = vld [vmem:[%s347 + $0x14] sm:$0xf]
        %v354 = vld [vmem:[%s347 + $0x18] sm:$0xf]
        %v355 = vld [vmem:[%s347 + $0x1c] sm:$0xf]
        %v364 = vunpack.c.l.b16 %v348
        %v365 = vunpack.c.l.b16 %v349
        %v366 = vunpack.c.l.b16 %v350
        %v367 = vunpack.c.l.b16 %v351
        %v368 = vunpack.c.l.b16 %v352
        %v369 = vunpack.c.l.b16 %v353
        %v370 = vunpack.c.l.b16 %v354
        %v371 = vunpack.c.l.b16 %v355
        %v372 = vpack.c.b16 %v365, %v364
        %v373 = vpack.c.b16 %v367, %v366
        %v374 = vpack.c.b16 %v369, %v368
        %v375 = vpack.c.b16 %v371, %v370
        %vm380 = vcmask 523264
        %v382 = vsel %vm380, %v346, 0
        %384 = vmatprep.subr.bf16.mxu0 0
        %385 = vmatpush1.bf16.msra.mxu0 %v372
        %386 = vmatprep.subr.bf16.mxu0 0
        %387 = vmatpush1.bf16.msra.mxu0 %v373
        %388 = vmatprep.subr.bf16.mxu0 0
        %389 = vmatpush1.bf16.msra.mxu0 %v374
        %390 = vmatprep.subr.bf16.mxu0 0
        %391 = vmatpush1.bf16.msra.mxu0 %v375
        %392 = vmatprep.subr.bf16.mxu0 0
        %393 = vmatpush1.bf16.msra.mxu0 0
        %394 = vmatprep.subr.bf16.mxu0 0
        %395 = vmatpush1.bf16.msra.mxu0 0
        %396 = vmatprep.subr.bf16.mxu0 0
        %397 = vmatpush1.bf16.msra.mxu0 0
        %398 = vmatprep.subr.bf16.mxu0 0
        %399 = vmatpush1.bf16.msra.mxu0 0
        %400 = vmatprep.subr.bf16.mxu0 0
        %401 = vmatpush1.bf16.msra.mxu0 0
        %402 = vmatprep.subr.bf16.mxu0 0
        %403 = vmatpush1.bf16.msra.mxu0 0
        %404 = vmatprep.subr.bf16.mxu0 0
        %405 = vmatpush1.bf16.msra.mxu0 0
        %406 = vmatprep.subr.bf16.mxu0 0
        %407 = vmatpush1.bf16.msra.mxu0 0
        %408 = vmatprep.subr.bf16.mxu0 0
        %409 = vmatpush1.bf16.msra.mxu0 0
        %410 = vmatprep.subr.bf16.mxu0 0
        %411 = vmatpush1.bf16.msra.mxu0 0
        %412 = vmatprep.subr.bf16.mxu0 0
        %413 = vmatpush1.bf16.msra.mxu0 0
        %414 = vmatprep.subr.bf16.mxu0 0
        %415 = vmatpush1.bf16.msra.mxu0 0
        %416 = vmatprep.mubr.bf16.mxu0 0
        %417 = vmatmul.mubr.bf16.gmra.mrb[0].mxu0 %v382
        %v418 = vpop.f32.mrb[0].mxu0
        %v419 = vadd.f32 0.0, %v418
        %v420 = vpop.f32.mrb[0].mxu0
        %v421 = vpop.f32.mrb[0].mxu0
        %v422 = vadd.f32 0.0, %v421
        %v423 = vpop.f32.mrb[0].mxu0
        %424 = vdwg.mxu0
        %425 = vst [vmem:[#allocation2] sm:$0xff] %v419
        %426 = vst [vmem:[#allocation2 + $0x8] sm:$0xff] %v422
        %v427 = vld [vmem:[#allocation6] sm:$0xf]
        %v428 = vld [vmem:[#allocation6 + $0x4] sm:$0xf]
        %v429 = vld [vmem:[#allocation6 + $0x8] sm:$0xf]
        %v430 = vld [vmem:[#allocation6 + $0xc] sm:$0xf]
        %v431 = vld [vmem:[#allocation6 + $0x10] sm:$0xf]
        %v432 = vld [vmem:[#allocation6 + $0x14] sm:$0xf]
        %v433 = vld [vmem:[#allocation6 + $0x18] sm:$0xf]
        %v434 = vld [vmem:[#allocation6 + $0x1c] sm:$0xf]
        %v443 = vunpack.c.l.b16 %v427
        %v444 = vunpack.c.l.b16 %v428
        %v445 = vunpack.c.l.b16 %v429
        %v446 = vunpack.c.l.b16 %v430
        %v447 = vunpack.c.l.b16 %v431
        %v448 = vunpack.c.l.b16 %v432
        %v449 = vunpack.c.l.b16 %v433
        %v450 = vunpack.c.l.b16 %v434
        %v451 = vpack.c.b16 %v444, %v443
        %v452 = vpack.c.b16 %v446, %v445
        %v453 = vpack.c.b16 %v448, %v447
        %v454 = vpack.c.b16 %v450, %v449
        %459 = vmatprep.subr.bf16.mxu0 0
        %460 = vmatpush1.bf16.msra.mxu0 %v451
        %461 = vmatprep.subr.bf16.mxu0 0
        %462 = vmatpush1.bf16.msra.mxu0 %v452
        %463 = vmatprep.subr.bf16.mxu0 0
        %464 = vmatpush1.bf16.msra.mxu0 %v453
        %465 = vmatprep.subr.bf16.mxu0 0
        %466 = vmatpush1.bf16.msra.mxu0 %v454
        %467 = vmatprep.subr.bf16.mxu0 0
        %468 = vmatpush1.bf16.msra.mxu0 0
        %469 = vmatprep.subr.bf16.mxu0 0
        %470 = vmatpush1.bf16.msra.mxu0 0
        %471 = vmatprep.subr.bf16.mxu0 0
        %472 = vmatpush1.bf16.msra.mxu0 0
        %473 = vmatprep.subr.bf16.mxu0 0
        %474 = vmatpush1.bf16.msra.mxu0 0
        %475 = vmatprep.subr.bf16.mxu0 0
        %476 = vmatpush1.bf16.msra.mxu0 0
        %477 = vmatprep.subr.bf16.mxu0 0
        %478 = vmatpush1.bf16.msra.mxu0 0
        %479 = vmatprep.subr.bf16.mxu0 0
        %480 = vmatpush1.bf16.msra.mxu0 0
        %481 = vmatprep.subr.bf16.mxu0 0
        %482 = vmatpush1.bf16.msra.mxu0 0
        %483 = vmatprep.subr.bf16.mxu0 0
        %484 = vmatpush1.bf16.msra.mxu0 0
        %485 = vmatprep.subr.bf16.mxu0 0
        %486 = vmatpush1.bf16.msra.mxu0 0
        %487 = vmatprep.subr.bf16.mxu0 0
        %488 = vmatpush1.bf16.msra.mxu0 0
        %489 = vmatprep.subr.bf16.mxu0 0
        %490 = vmatpush1.bf16.msra.mxu0 0
        %491 = vmatprep.mubr.bf16.mxu0 0
        %492 = vmatmul.mubr.bf16.gmra.mrb[0].mxu0 %v382
        %v493 = vpop.f32.mrb[0].mxu0
        %v494 = vadd.f32 0.0, %v493
        %v495 = vpop.f32.mrb[0].mxu0
        %v496 = vpop.f32.mrb[0].mxu0
        %v497 = vadd.f32 0.0, %v496
        %v498 = vpop.f32.mrb[0].mxu0
        %499 = vdwg.mxu0
        %v500 = vld [vmem:[#allocation2 + $0x1] sm:$0xff]
        %v501 = vld [vmem:[#allocation2 + $0x9] sm:$0x7f]
        %v502 = vadd.f32 %v500, %v494
        %v503 = vadd.f32 %v501, %v497
        %504 = vst [vmem:[#allocation2 + $0x1] sm:$0xff] %v502
        %505 = vst [vmem:[#allocation2 + $0x9] sm:$0x7f] %v503
        %s506 = scalar_lea.vmem [#allocation6], 64
        %v507 = vld [vmem:[%s506] sm:$0xf]
        %v508 = vld [vmem:[%s506 + $0x4] sm:$0xf]
        %v509 = vld [vmem:[%s506 + $0x8] sm:$0xf]
        %v510 = vld [vmem:[%s506 + $0xc] sm:$0xf]
        %v511 = vld [vmem:[%s506 + $0x10] sm:$0xf]
        %v512 = vld [vmem:[%s506 + $0x14] sm:$0xf]
        %v513 = vld [vmem:[%s506 + $0x18] sm:$0xf]
        %v514 = vld [vmem:[%s506 + $0x1c] sm:$0xf]
        %v515 = vshrl.u32 %v346, 16
        %v517 = vshll.u32 %v346, 16
        %v519 = vrot.slane %v517, 1
        %v520 = vor.u32 %v515, %v519
        %v529 = vunpack.c.l.b16 %v507
        %v530 = vunpack.c.l.b16 %v508
        %v531 = vunpack.c.l.b16 %v509
        %v532 = vunpack.c.l.b16 %v510
        %v533 = vunpack.c.l.b16 %v511
        %v534 = vunpack.c.l.b16 %v512
        %v535 = vunpack.c.l.b16 %v513
        %v536 = vunpack.c.l.b16 %v514
        %v537 = vpack.c.b16 %v530, %v529
        %v538 = vpack.c.b16 %v532, %v531
        %v539 = vpack.c.b16 %v534, %v533
        %v540 = vpack.c.b16 %v536, %v535
        %v546 = vsel %vm380, %v520, 0
        %548 = vmatprep.subr.bf16.mxu0 0
        %549 = vmatpush1.bf16.msra.mxu0 %v537
        %550 = vmatprep.subr.bf16.mxu0 0
        %551 = vmatpush1.bf16.msra.mxu0 %v538
        %552 = vmatprep.subr.bf16.mxu0 0
        %553 = vmatpush1.bf16.msra.mxu0 %v539
        %554 = vmatprep.subr.bf16.mxu0 0
        %555 = vmatpush1.bf16.msra.mxu0 %v540
        %556 = vmatprep.subr.bf16.mxu0 0
        %557 = vmatpush1.bf16.msra.mxu0 0
        %558 = vmatprep.subr.bf16.mxu0 0
        %559 = vmatpush1.bf16.msra.mxu0 0
        %560 = vmatprep.subr.bf16.mxu0 0
        %561 = vmatpush1.bf16.msra.mxu0 0
        %562 = vmatprep.subr.bf16.mxu0 0
        %563 = vmatpush1.bf16.msra.mxu0 0
        %564 = vmatprep.subr.bf16.mxu0 0
        %565 = vmatpush1.bf16.msra.mxu0 0
        %566 = vmatprep.subr.bf16.mxu0 0
        %567 = vmatpush1.bf16.msra.mxu0 0
        %568 = vmatprep.subr.bf16.mxu0 0
        %569 = vmatpush1.bf16.msra.mxu0 0
        %570 = vmatprep.subr.bf16.mxu0 0
        %571 = vmatpush1.bf16.msra.mxu0 0
        %572 = vmatprep.subr.bf16.mxu0 0
        %573 = vmatpush1.bf16.msra.mxu0 0
        %574 = vmatprep.subr.bf16.mxu0 0
        %575 = vmatpush1.bf16.msra.mxu0 0
        %576 = vmatprep.subr.bf16.mxu0 0
        %577 = vmatpush1.bf16.msra.mxu0 0
        %578 = vmatprep.subr.bf16.mxu0 0
        %579 = vmatpush1.bf16.msra.mxu0 0
        %580 = vmatprep.mubr.bf16.mxu0 0
        %581 = vmatmul.mubr.bf16.gmra.mrb[0].mxu0 %v546
        %v582 = vpop.f32.mrb[0].mxu0
        %v583 = vadd.f32 0.0, %v582
        %v584 = vpop.f32.mrb[0].mxu0
        %v585 = vpop.f32.mrb[0].mxu0
        %v586 = vadd.f32 0.0, %v585
        %v587 = vpop.f32.mrb[0].mxu0
        %588 = vdwg.mxu0
        %v589 = vld [vmem:[#allocation2] sm:$0xff]
        %v590 = vld [vmem:[#allocation2 + $0x8] sm:$0x7f]
        %v591 = vadd.f32 %v589, %v583
        %v592 = vadd.f32 %v590, %v586
        %593 = vst [vmem:[#allocation2] sm:$0xff] %v591
        %594 = vst [vmem:[#allocation2 + $0x8] sm:$0x7f] %v592
        %v595 = vld [vmem:[#allocation2] sm:$0xff]
        %v596 = vld [vmem:[#allocation2 + $0x8] sm:$0xff]
        %v597 = vld [vmem:[%s2] sm:$0x1]
        %v599 = vlaneseq
        %v600 = vshrl.u32 %v599, 7
        %v601 = vsub.s32 0, %v600
        %v602 = vrot.slane %v597, %v601
        %v604 = vadd.f32 %v595, %v602
        %v605 = vadd.f32 %v596, %v602
        %v606 = vmax.f32 %v604, 0.0
        %v607 = vmax.f32 %v605, 0.0
        %v608 = vpack.c.bf16 %v607, %v606
        %s609 = scalar_lea.vmem [#allocation8], 64
        %v610 = vld [vmem:[%s609] sm:$0xf]
        %v611 = vld [vmem:[%s609 + $0x4] sm:$0xf]
        %v612 = vld [vmem:[%s609 + $0x8] sm:$0xf]
        %v613 = vld [vmem:[%s609 + $0xc] sm:$0xf]
        %v614 = vld [vmem:[%s609 + $0x10] sm:$0xf]
        %v615 = vld [vmem:[%s609 + $0x14] sm:$0xf]
        %v616 = vld [vmem:[%s609 + $0x18] sm:$0xf]
        %v617 = vld [vmem:[%s609 + $0x1c] sm:$0xf]
        %v618 = vld [vmem:[%s609 + $0x20] sm:$0xf]
        %v619 = vld [vmem:[%s609 + $0x24] sm:$0xf]
        %v620 = vld [vmem:[%s609 + $0x28] sm:$0xf]
        %v621 = vld [vmem:[%s609 + $0x2c] sm:$0xf]
        %v622 = vld [vmem:[%s609 + $0x30] sm:$0xf]
        %v623 = vld [vmem:[%s609 + $0x34] sm:$0xf]
        %v624 = vld [vmem:[%s609 + $0x38] sm:$0xf]
        %v625 = vld [vmem:[%s609 + $0x3c] sm:$0xf]
        %v642 = vunpack.c.l.b16 %v610
        %v643 = vunpack.c.l.b16 %v611
        %v644 = vunpack.c.l.b16 %v612
        %v645 = vunpack.c.l.b16 %v613
        %v646 = vunpack.c.l.b16 %v614
        %v647 = vunpack.c.l.b16 %v615
        %v648 = vunpack.c.l.b16 %v616
        %v649 = vunpack.c.l.b16 %v617
        %v650 = vunpack.c.l.b16 %v618
        %v651 = vunpack.c.l.b16 %v619
        %v652 = vunpack.c.l.b16 %v620
        %v653 = vunpack.c.l.b16 %v621
        %v654 = vunpack.c.l.b16 %v622
        %v655 = vunpack.c.l.b16 %v623
        %v656 = vunpack.c.l.b16 %v624
        %v657 = vunpack.c.l.b16 %v625
        %v658 = vpack.c.b16 %v643, %v642
        %v659 = vpack.c.b16 %v645, %v644
        %v660 = vpack.c.b16 %v647, %v646
        %v661 = vpack.c.b16 %v649, %v648
        %v662 = vpack.c.b16 %v651, %v650
        %v663 = vpack.c.b16 %v653, %v652
        %v664 = vpack.c.b16 %v655, %v654
        %v665 = vpack.c.b16 %v657, %v656
        %674 = vmatprep.subr.bf16.mxu0 0
        %675 = vmatpush1.bf16.msra.mxu0 %v658
        %676 = vmatprep.subr.bf16.mxu0 0
        %677 = vmatpush1.bf16.msra.mxu0 %v659
        %678 = vmatprep.subr.bf16.mxu0 0
        %679 = vmatpush1.bf16.msra.mxu0 %v660
        %680 = vmatprep.subr.bf16.mxu0 0
        %681 = vmatpush1.bf16.msra.mxu0 %v661
        %682 = vmatprep.subr.bf16.mxu0 0
        %683 = vmatpush1.bf16.msra.mxu0 %v662
        %684 = vmatprep.subr.bf16.mxu0 0
        %685 = vmatpush1.bf16.msra.mxu0 %v663
        %686 = vmatprep.subr.bf16.mxu0 0
        %687 = vmatpush1.bf16.msra.mxu0 %v664
        %688 = vmatprep.subr.bf16.mxu0 0
        %689 = vmatpush1.bf16.msra.mxu0 %v665
        %690 = vmatprep.subr.bf16.mxu0 0
        %691 = vmatpush1.bf16.msra.mxu0 0
        %692 = vmatprep.subr.bf16.mxu0 0
        %693 = vmatpush1.bf16.msra.mxu0 0
        %694 = vmatprep.subr.bf16.mxu0 0
        %695 = vmatpush1.bf16.msra.mxu0 0
        %696 = vmatprep.subr.bf16.mxu0 0
        %697 = vmatpush1.bf16.msra.mxu0 0
        %698 = vmatprep.subr.bf16.mxu0 0
        %699 = vmatpush1.bf16.msra.mxu0 0
        %700 = vmatprep.subr.bf16.mxu0 0
        %701 = vmatpush1.bf16.msra.mxu0 0
        %702 = vmatprep.subr.bf16.mxu0 0
        %703 = vmatpush1.bf16.msra.mxu0 0
        %704 = vmatprep.subr.bf16.mxu0 0
        %705 = vmatpush1.bf16.msra.mxu0 0
        %706 = vmatprep.mubr.bf16.mxu0 0
        %707 = vmatmul.mubr.bf16.gmra.mrb[0].mxu0 %v608
        %v708 = vpop.f32.mrb[0].mxu0
        %v709 = vadd.f32 0.0, %v708
        %v710 = vpop.f32.mrb[0].mxu0
        %v711 = vpop.f32.mrb[0].mxu0
        %v712 = vadd.f32 0.0, %v711
        %v713 = vpop.f32.mrb[0].mxu0
        %714 = vdwg.mxu0
        %715 = vst [vmem:[#allocation2] sm:$0xff] %v709
        %716 = vst [vmem:[#allocation2 + $0x8] sm:$0xff] %v712
        %v717 = vld [vmem:[#allocation8] sm:$0xf]
        %v718 = vld [vmem:[#allocation8 + $0x4] sm:$0xf]
        %v719 = vld [vmem:[#allocation8 + $0x8] sm:$0xf]
        %v720 = vld [vmem:[#allocation8 + $0xc] sm:$0xf]
        %v721 = vld [vmem:[#allocation8 + $0x10] sm:$0xf]
        %v722 = vld [vmem:[#allocation8 + $0x14] sm:$0xf]
        %v723 = vld [vmem:[#allocation8 + $0x18] sm:$0xf]
        %v724 = vld [vmem:[#allocation8 + $0x1c] sm:$0xf]
        %v725 = vld [vmem:[#allocation8 + $0x20] sm:$0xf]
        %v726 = vld [vmem:[#allocation8 + $0x24] sm:$0xf]
        %v727 = vld [vmem:[#allocation8 + $0x28] sm:$0xf]
        %v728 = vld [vmem:[#allocation8 + $0x2c] sm:$0xf]
        %v729 = vld [vmem:[#allocation8 + $0x30] sm:$0xf]
        %v730 = vld [vmem:[#allocation8 + $0x34] sm:$0xf]
        %v731 = vld [vmem:[#allocation8 + $0x38] sm:$0xf]
        %v732 = vld [vmem:[#allocation8 + $0x3c] sm:$0xf]
        %v749 = vunpack.c.l.b16 %v717
        %v750 = vunpack.c.l.b16 %v718
        %v751 = vunpack.c.l.b16 %v719
        %v752 = vunpack.c.l.b16 %v720
        %v753 = vunpack.c.l.b16 %v721
        %v754 = vunpack.c.l.b16 %v722
        %v755 = vunpack.c.l.b16 %v723
        %v756 = vunpack.c.l.b16 %v724
        %v757 = vunpack.c.l.b16 %v725
        %v758 = vunpack.c.l.b16 %v726
        %v759 = vunpack.c.l.b16 %v727
        %v760 = vunpack.c.l.b16 %v728
        %v761 = vunpack.c.l.b16 %v729
        %v762 = vunpack.c.l.b16 %v730
        %v763 = vunpack.c.l.b16 %v731
        %v764 = vunpack.c.l.b16 %v732
        %v765 = vpack.c.b16 %v750, %v749
        %v766 = vpack.c.b16 %v752, %v751
        %v767 = vpack.c.b16 %v754, %v753
        %v768 = vpack.c.b16 %v756, %v755
        %v769 = vpack.c.b16 %v758, %v757
        %v770 = vpack.c.b16 %v760, %v759
        %v771 = vpack.c.b16 %v762, %v761
        %v772 = vpack.c.b16 %v764, %v763
        %781 = vmatprep.subr.bf16.mxu0 0
        %782 = vmatpush1.bf16.msra.mxu0 %v765
        %783 = vmatprep.subr.bf16.mxu0 0
        %784 = vmatpush1.bf16.msra.mxu0 %v766
        %785 = vmatprep.subr.bf16.mxu0 0
        %786 = vmatpush1.bf16.msra.mxu0 %v767
        %787 = vmatprep.subr.bf16.mxu0 0
        %788 = vmatpush1.bf16.msra.mxu0 %v768
        %789 = vmatprep.subr.bf16.mxu0 0
        %790 = vmatpush1.bf16.msra.mxu0 %v769
        %791 = vmatprep.subr.bf16.mxu0 0
        %792 = vmatpush1.bf16.msra.mxu0 %v770
        %793 = vmatprep.subr.bf16.mxu0 0
        %794 = vmatpush1.bf16.msra.mxu0 %v771
        %795 = vmatprep.subr.bf16.mxu0 0
        %796 = vmatpush1.bf16.msra.mxu0 %v772
        %797 = vmatprep.subr.bf16.mxu0 0
        %798 = vmatpush1.bf16.msra.mxu0 0
        %799 = vmatprep.subr.bf16.mxu0 0
        %800 = vmatpush1.bf16.msra.mxu0 0
        %801 = vmatprep.subr.bf16.mxu0 0
        %802 = vmatpush1.bf16.msra.mxu0 0
        %803 = vmatprep.subr.bf16.mxu0 0
        %804 = vmatpush1.bf16.msra.mxu0 0
        %805 = vmatprep.subr.bf16.mxu0 0
        %806 = vmatpush1.bf16.msra.mxu0 0
        %807 = vmatprep.subr.bf16.mxu0 0
        %808 = vmatpush1.bf16.msra.mxu0 0
        %809 = vmatprep.subr.bf16.mxu0 0
        %810 = vmatpush1.bf16.msra.mxu0 0
        %811 = vmatprep.subr.bf16.mxu0 0
        %812 = vmatpush1.bf16.msra.mxu0 0
        %813 = vmatprep.mubr.bf16.mxu0 0
        %814 = vmatmul.mubr.bf16.gmra.mrb[0].mxu0 %v608
        %v815 = vpop.f32.mrb[0].mxu0
        %v816 = vadd.f32 0.0, %v815
        %v817 = vpop.f32.mrb[0].mxu0
        %v818 = vpop.f32.mrb[0].mxu0
        %v819 = vadd.f32 0.0, %v818
        %v820 = vpop.f32.mrb[0].mxu0
        %821 = vdwg.mxu0
        %v822 = vld [vmem:[#allocation2 + $0x1] sm:$0xff]
        %v823 = vld [vmem:[#allocation2 + $0x9] sm:$0x7f]
        %v824 = vadd.f32 %v822, %v816
        %v825 = vadd.f32 %v823, %v819
        %826 = vst [vmem:[#allocation2 + $0x1] sm:$0xff] %v824
        %827 = vst [vmem:[#allocation2 + $0x9] sm:$0x7f] %v825
        %s828 = scalar_lea.vmem [#allocation8], 128
        %v829 = vld [vmem:[%s828] sm:$0xf]
        %v830 = vld [vmem:[%s828 + $0x4] sm:$0xf]
        %v831 = vld [vmem:[%s828 + $0x8] sm:$0xf]
        %v832 = vld [vmem:[%s828 + $0xc] sm:$0xf]
        %v833 = vld [vmem:[%s828 + $0x10] sm:$0xf]
        %v834 = vld [vmem:[%s828 + $0x14] sm:$0xf]
        %v835 = vld [vmem:[%s828 + $0x18] sm:$0xf]
        %v836 = vld [vmem:[%s828 + $0x1c] sm:$0xf]
        %v837 = vld [vmem:[%s828 + $0x20] sm:$0xf]
        %v838 = vld [vmem:[%s828 + $0x24] sm:$0xf]
        %v839 = vld [vmem:[%s828 + $0x28] sm:$0xf]
        %v840 = vld [vmem:[%s828 + $0x2c] sm:$0xf]
        %v841 = vld [vmem:[%s828 + $0x30] sm:$0xf]
        %v842 = vld [vmem:[%s828 + $0x34] sm:$0xf]
        %v843 = vld [vmem:[%s828 + $0x38] sm:$0xf]
        %v844 = vld [vmem:[%s828 + $0x3c] sm:$0xf]
        %v846 = vshrl.u32 %v608, 16
        %v848 = vshll.u32 %v608, 16
        %v850 = vrot.slane %v848, 1
        %v851 = vor.u32 %v846, %v850
        %v869 = vunpack.c.l.b16 %v829
        %v870 = vunpack.c.l.b16 %v830
        %v871 = vunpack.c.l.b16 %v831
        %v872 = vunpack.c.l.b16 %v832
        %v873 = vunpack.c.l.b16 %v833
        %v874 = vunpack.c.l.b16 %v834
        %v875 = vunpack.c.l.b16 %v835
        %v876 = vunpack.c.l.b16 %v836
        %v877 = vunpack.c.l.b16 %v837
        %v878 = vunpack.c.l.b16 %v838
        %v879 = vunpack.c.l.b16 %v839
        %v880 = vunpack.c.l.b16 %v840
        %v881 = vunpack.c.l.b16 %v841
        %v882 = vunpack.c.l.b16 %v842
        %v883 = vunpack.c.l.b16 %v843
        %v884 = vunpack.c.l.b16 %v844
        %v885 = vpack.c.b16 %v870, %v869
        %v886 = vpack.c.b16 %v872, %v871
        %v887 = vpack.c.b16 %v874, %v873
        %v888 = vpack.c.b16 %v876, %v875
        %v889 = vpack.c.b16 %v878, %v877
        %v890 = vpack.c.b16 %v880, %v879
        %v891 = vpack.c.b16 %v882, %v881
        %v892 = vpack.c.b16 %v884, %v883
        %901 = vmatprep.subr.bf16.mxu0 0
        %902 = vmatpush1.bf16.msra.mxu0 %v885
        %903 = vmatprep.subr.bf16.mxu0 0
        %904 = vmatpush1.bf16.msra.mxu0 %v886
        %905 = vmatprep.subr.bf16.mxu0 0
        %906 = vmatpush1.bf16.msra.mxu0 %v887
        %907 = vmatprep.subr.bf16.mxu0 0
        %908 = vmatpush1.bf16.msra.mxu0 %v888
        %909 = vmatprep.subr.bf16.mxu0 0
        %910 = vmatpush1.bf16.msra.mxu0 %v889
        %911 = vmatprep.subr.bf16.mxu0 0
        %912 = vmatpush1.bf16.msra.mxu0 %v890
        %913 = vmatprep.subr.bf16.mxu0 0
        %914 = vmatpush1.bf16.msra.mxu0 %v891
        %915 = vmatprep.subr.bf16.mxu0 0
        %916 = vmatpush1.bf16.msra.mxu0 %v892
        %917 = vmatprep.subr.bf16.mxu0 0
        %918 = vmatpush1.bf16.msra.mxu0 0
        %919 = vmatprep.subr.bf16.mxu0 0
        %920 = vmatpush1.bf16.msra.mxu0 0
        %921 = vmatprep.subr.bf16.mxu0 0
        %922 = vmatpush1.bf16.msra.mxu0 0
        %923 = vmatprep.subr.bf16.mxu0 0
        %924 = vmatpush1.bf16.msra.mxu0 0
        %925 = vmatprep.subr.bf16.mxu0 0
        %926 = vmatpush1.bf16.msra.mxu0 0
        %927 = vmatprep.subr.bf16.mxu0 0
        %928 = vmatpush1.bf16.msra.mxu0 0
        %929 = vmatprep.subr.bf16.mxu0 0
        %930 = vmatpush1.bf16.msra.mxu0 0
        %931 = vmatprep.subr.bf16.mxu0 0
        %932 = vmatpush1.bf16.msra.mxu0 0
        %933 = vmatprep.mubr.bf16.mxu0 0
        %934 = vmatmul.mubr.bf16.gmra.mrb[0].mxu0 %v851
        %v935 = vpop.f32.mrb[0].mxu0
        %v936 = vadd.f32 0.0, %v935
        %v937 = vpop.f32.mrb[0].mxu0
        %v938 = vpop.f32.mrb[0].mxu0
        %v939 = vadd.f32 0.0, %v938
        %v940 = vpop.f32.mrb[0].mxu0
        %941 = vdwg.mxu0
        %v942 = vld [vmem:[#allocation2] sm:$0xff]
        %v943 = vld [vmem:[#allocation2 + $0x8] sm:$0x7f]
        %v944 = vadd.f32 %v942, %v936
        %v945 = vadd.f32 %v943, %v939
        %946 = vst [vmem:[#allocation2] sm:$0xff] %v944
        %947 = vst [vmem:[#allocation2 + $0x8] sm:$0x7f] %v945
        %v948 = vld [vmem:[#allocation2] sm:$0xff]
        %v949 = vld [vmem:[#allocation2 + $0x8] sm:$0xff]
        %v950 = vld [vmem:[%s4] sm:$0x1]
        %v952 = vlaneseq
        %v953 = vshrl.u32 %v952, 7
        %v954 = vsub.s32 0, %v953
        %v955 = vrot.slane %v950, %v954
        %v957 = vadd.f32 %v948, %v955
        %v958 = vadd.f32 %v949, %v955
        %v959 = vpack.c.bf16 %v343, %v342
        %v960 = vld [vmem:[#allocation9] sm:$0xf]
        %v961 = vld [vmem:[#allocation9 + $0x4] sm:$0xf]
        %v962 = vld [vmem:[#allocation9 + $0x8] sm:$0xf]
        %v963 = vld [vmem:[#allocation9 + $0xc] sm:$0xf]
        %v964 = vld [vmem:[#allocation9 + $0x10] sm:$0xf]
        %v965 = vld [vmem:[#allocation9 + $0x14] sm:$0xf]
        %v966 = vld [vmem:[#allocation9 + $0x18] sm:$0xf]
        %v967 = vld [vmem:[#allocation9 + $0x1c] sm:$0xf]
        %v968 = vld [vmem:[%s6] sm:$0x1]
        %v970 = vlaneseq
        %v971 = vshrl.u32 %v970, 7
        %v972 = vsub.s32 0, %v971
        %v973 = vrot.slane %v968, %v972
        %v983 = vunpack.c.l.b16 %v960
        %v984 = vunpack.c.l.b16 %v961
        %v985 = vunpack.c.l.b16 %v962
        %v986 = vunpack.c.l.b16 %v963
        %v987 = vunpack.c.l.b16 %v964
        %v988 = vunpack.c.l.b16 %v965
        %v989 = vunpack.c.l.b16 %v966
        %v990 = vunpack.c.l.b16 %v967
        %v991 = vpack.c.b16 %v984, %v983
        %v992 = vpack.c.b16 %v986, %v985
        %v993 = vpack.c.b16 %v988, %v987
        %v994 = vpack.c.b16 %v990, %v989
        %v1000 = vsel %vm380, %v959, 0
        %1002 = vmatprep.subr.bf16.mxu0 0
        %1003 = vmatpush1.bf16.msra.mxu0 %v991
        %1004 = vmatprep.subr.bf16.mxu0 0
        %1005 = vmatpush1.bf16.msra.mxu0 %v992
        %1006 = vmatprep.subr.bf16.mxu0 0
        %1007 = vmatpush1.bf16.msra.mxu0 %v993
        %1008 = vmatprep.subr.bf16.mxu0 0
        %1009 = vmatpush1.bf16.msra.mxu0 %v994
        %1010 = vmatprep.subr.bf16.mxu0 0
        %1011 = vmatpush1.bf16.msra.mxu0 0
        %1012 = vmatprep.subr.bf16.mxu0 0
        %1013 = vmatpush1.bf16.msra.mxu0 0
        %1014 = vmatprep.subr.bf16.mxu0 0
        %1015 = vmatpush1.bf16.msra.mxu0 0
        %1016 = vmatprep.subr.bf16.mxu0 0
        %1017 = vmatpush1.bf16.msra.mxu0 0
        %1018 = vmatprep.subr.bf16.mxu0 0
        %1019 = vmatpush1.bf16.msra.mxu0 0
        %1020 = vmatprep.subr.bf16.mxu0 0
        %1021 = vmatpush1.bf16.msra.mxu0 0
        %1022 = vmatprep.subr.bf16.mxu0 0
        %1023 = vmatpush1.bf16.msra.mxu0 0
        %1024 = vmatprep.subr.bf16.mxu0 0
        %1025 = vmatpush1.bf16.msra.mxu0 0
        %1026 = vmatprep.subr.bf16.mxu0 0
        %1027 = vmatpush1.bf16.msra.mxu0 0
        %1028 = vmatprep.subr.bf16.mxu0 0
        %1029 = vmatpush1.bf16.msra.mxu0 0
        %1030 = vmatprep.subr.bf16.mxu0 0
        %1031 = vmatpush1.bf16.msra.mxu0 0
        %1032 = vmatprep.subr.bf16.mxu0 0
        %1033 = vmatpush1.bf16.msra.mxu0 0
        %1034 = vmatprep.mubr.bf16.mxu0 0
        %1035 = vmatmul.mubr.bf16.gmra.mrb[0].mxu0 %v1000
        %v1036 = vpop.f32.mrb[0].mxu0
        %v1037 = vadd.f32 %v973, %v1036
        %v1038 = vpop.f32.mrb[0].mxu0
        %v1039 = vpop.f32.mrb[0].mxu0
        %v1040 = vadd.f32 %v973, %v1039
        %v1041 = vpop.f32.mrb[0].mxu0
        %1042 = vdwg.mxu0
        %v1043 = vadd.f32 %v1037, %v957
        %v1044 = vadd.f32 %v1040, %v958
        %1045 = vst [vmem:[%s340] sm:$0xff] %v1043
        %1046 = vst [vmem:[%s340 + $0x8] sm:$0xff] %v1044
        %s1047 = sand.u32 %s186, 1
        %s1048 = scalar_lea.sflag [#allocation5], %s1047
        %s1049 = sand.u32 %s186, 1
        %s1050 = smul.addr %s1049, 16
        %s1051 = scalar_lea.vmem [#allocation11], %s1050
        // Predicated region
        $region65: #{tpu_custom_call.1} parent=47 // pred_check
          %p1052 = pneg %p196
        $region66: #{tpu_custom_call.1} parent=47 // pred_check_branch
          %1054 = sbr.rel (%p1052) target = $region68
        $region67: #{tpu_custom_call.1} parent=47 // pred_region
          %s1056 = ssub.s32 256, 256
          %1057 = vsyncadd %s1048, %s1056
          %s1058 = smul.addr %s26, 2
          %s1059 = smul.addr %s1058, 128
          %s1060 = scalar_lea.hbm %s7, %s1059
          %s1061 = sshll.u32 %s1051, 4
          %s1062 = int_to_ptr.vmem [resolvable:$true] %s1061
          %1067 = dma.vmem_to_hbm [thread:$0]  %s1062, 256, %s1060, %s1048, 128, 128, 8
        $region68: #{tpu_custom_call.1} parent=47 // pred_fallthru
          _
      $region48: #{tpu_custom_call.1} parent=5 // pred_fallthru
        _
      %p1068 = scmp.le.s32.totalorder 2, %s21
      // Predicated region
      $region69: #{tpu_custom_call.1} parent=5 // pred_check
        %p1069 = pneg %p1068
      $region70: #{tpu_custom_call.1} parent=5 // pred_check_branch
        %1071 = sbr.rel (%p1069) target = $region72
      $region71: #{tpu_custom_call.1} parent=5 // pred_region
        %s1072 = ssub.s32 %s21, 2
        // Predicated region
        $region73: #{tpu_custom_call.1} parent=71 // pred_check
          %p1073 = pneg %p202
        $region74: #{tpu_custom_call.1} parent=71 // pred_check_branch
          %1075 = sbr.rel (%p1073) target = $region76
        $region75: #{tpu_custom_call.1} parent=71 // pred_region
          %s1076 = sand.u32 %s187, 1
          %s1077 = scalar_lea.sflag [#allocation5], %s1076
          %s1078 = sand.u32 %s187, 1
          %s1079 = smul.addr %s1078, 16
          %s1080 = scalar_lea.vmem [#allocation11], %s1079
          %1081 = dma.done %s1077, 256
        $region76: #{tpu_custom_call.1} parent=71 // pred_fallthru
          _
      $region72: #{tpu_custom_call.1} parent=5 // pred_fallthru
        _
    $region6: #{tpu_custom_call.1} parent=1 // loop_footer
      %s25 = sadd.s32 1, %s21
    $region7: #{tpu_custom_call.1} parent=1 // loop_footer_branch
      %20 = sbr.rel target = $region3
    $region8: #{tpu_custom_call.1} parent=1 // loop_exit
      _
    %1082 = vsyncpa [#allocation4], 1
    %s1083 = scalar_lea.sflag [#allocation4], 1
    %1084 = vsyncpa %s1083, 1
    %1085 = vsyncpa [#allocation7], 1
    %1086 = vsyncpa [#allocation10], 1
    %1087 = vsyncpa [#allocation5], 1
    %s1088 = scalar_lea.sflag [#allocation5], 1
    %1089 = vsyncpa %s1088, 1

</llo_original>
